<compile_context>
chip_gen: v5e
topology: v5e:2x2
jax: 0.10.0
libtpu: 0.0.40
codegen_flags: <defaults>
</compile_context>

<pallas_src>
import functools

import jax
import jax.numpy as jnp
from jax import lax
from jax.experimental import pallas as pl
from jax.experimental.pallas import tpu as pltpu

_MULTISCALE_BW = (0.2, 0.5, 0.9, 1.3)
_RBF_BW = (10.0, 15.0, 20.0, 50.0)


def _round_up(x, m):
    return (x + m - 1) // m * m


def _gram_kernel(src_ref, tgt_ref, xx_ref, yy_ref, xy_ref, *, d_rem):
    """Accumulate Gram matrices over the D-tiled ("arbitrary") grid axis.

    Outputs are resident f32 (B, B) blocks (constant block index along the
    grid), used directly as accumulators.  `d_rem` is the static size of the
    valid ragged tail (0 means D divides tk and no masking is needed).
    """
    k = pl.program_id(0)

    @pl.when(k == 0)
    def _():
        xx_ref[...] = jnp.zeros_like(xx_ref)
        yy_ref[...] = jnp.zeros_like(yy_ref)
        xy_ref[...] = jnp.zeros_like(xy_ref)

    s = src_ref[...]
    t = tgt_ref[...]

    if d_rem:  # static: last block reads past D; zero the out-of-bounds lanes.
        last = pl.num_programs(0) - 1
        lane = lax.broadcasted_iota(jnp.int32, s.shape, 1)
        valid = jnp.logical_or(k < last, lane < d_rem)
        zero = jnp.zeros((), s.dtype)
        s = jnp.where(valid, s, zero)
        t = jnp.where(valid, t, zero)

    # torch.nan_to_num(x, nan=0.0) parity (also clamps ±inf), in the streaming
    # dtype (bf16 stays bf16 on the wire).
    s = jnp.nan_to_num(s)
    t = jnp.nan_to_num(t)

    # Contract over the feature (lane) axis on the MXU with f32 accumulation,
    # directly into the resident output blocks.
    dn = (((1,), (1,)), ((), ()))
    xx_ref[...] += lax.dot_general(s, s, dn, preferred_element_type=jnp.float32)
    yy_ref[...] += lax.dot_general(t, t, dn, preferred_element_type=jnp.float32)
    xy_ref[...] += lax.dot_general(s, t, dn, preferred_element_type=jnp.float32)


def _mmd_from_grams(xx, yy, xy, kernel_type):
    """Tiny (B, B) nonlinear epilogue; identical math to the PyTorch module."""
    rx = jnp.diagonal(xx)[None, :]          # (1, B) = diag(xx)
    ry = jnp.diagonal(yy)[None, :]          # (1, B) = diag(yy)
    dxx = rx.T + rx - 2.0 * xx
    dyy = ry.T + ry - 2.0 * yy
    dxy = rx.T + ry - 2.0 * xy

    XX = jnp.zeros_like(xx)
    YY = jnp.zeros_like(yy)
    XY = jnp.zeros_like(xy)
    if kernel_type == 'multiscale':
        for a in _MULTISCALE_BW:
            a2 = jnp.float32(a * a)
            XX = XX + a2 / (a2 + dxx)
            YY = YY + a2 / (a2 + dyy)
            XY = XY + a2 / (a2 + dxy)
    elif kernel_type == 'rbf':
        for a in _RBF_BW:
            inv_a = jnp.float32(1.0 / a)
            XX = XX + jnp.exp(-0.5 * dxx * inv_a)
            YY = YY + jnp.exp(-0.5 * dyy * inv_a)
            XY = XY + jnp.exp(-0.5 * dxy * inv_a)
    else:
        raise ValueError(f"unknown kernel_type: {kernel_type}")
    return jnp.mean(XX + YY - 2.0 * XY) * jnp.float32(0.1)


def _vmem_capacity_bytes():
    """Per-core VMEM capacity; conservative (v7x) fallback if unqueryable."""
    try:
        cap = int(getattr(pltpu.get_tpu_info(), "vmem_capacity_bytes"))
        if cap >= 16 * 1024 * 1024:
            return cap
    except Exception:
        pass
    return 64 * 1024 * 1024   # v7x per-TC VMEM: safe lower bound everywhere


@functools.partial(jax.jit, static_argnames=("kernel_type", "block_k"))
def simplified_mmd_loss(source, target, *, kernel_type='multiscale', block_k=None):
    """JAX/Pallas equivalent of SimplifiedMMDLoss.forward.

    `block_k` (optional) caps the per-step feature-tile width; by default the
    tile is sized as large as the chip's VMEM allows.
    """
    if source.ndim > 2:
        source = source.reshape(source.shape[0], -1)
    if target.ndim > 2:
        target = target.reshape(target.shape[0], -1)
    B, D = source.shape
    Bt, Dt = target.shape
    if B != Bt:
        raise ValueError(f"source/target batch sizes must match ({B} vs {Bt})")
    if D != Dt:
        raise ValueError(f"source/target feature dims must match ({D} vs {Dt})")

    dtype = jnp.promote_types(source.dtype, target.dtype)
    if not jnp.issubdtype(dtype, jnp.floating):
        dtype = jnp.float32
    source = source.astype(dtype)
    target = target.astype(dtype)
    itemsize = jnp.dtype(dtype).itemsize

    # ---- generation-aware VMEM accounting & feature-axis tiling ------------
    b_sub = _round_up(max(B, 8), 8)           # sublane-padded rows
    b_lane = _round_up(max(B, 128), 128)      # lane-padded output columns

    vmem_cap = _vmem_capacity_bytes()
    vmem_target = (vmem_cap * 3) // 4         # leave 25% for compiler scratch
    out_bytes = 3 * 2 * b_sub * b_lane * 4    # 3 f32 (B,B) accumulators (2 bufs)
    headroom = 4 * 1024 * 1024
    input_budget = max(vmem_target - out_bytes - headroom, 4 * 1024 * 1024)
    # 2 inputs x 2 pipeline buffers x (b_sub x tk) x itemsize <= input_budget
    max_tk = max(128, (input_budget // (4 * b_sub * itemsize)) // 128 * 128)

    lanes = _round_up(D, 128)                 # lane-aligned feature extent
    tk = min(max_tk, lanes)
    if block_k is not None:
        tk = min(tk, max(128, _round_up(block_k, 128)))
    ksteps = pl.cdiv(D, tk)
    d_rem = D % tk                            # static ragged tail (0 = clean)

    vmem_need = 4 * b_sub * tk * itemsize + out_bytes + headroom
    vmem_limit = int(min(vmem_cap, max(vmem_need, 16 * 1024 * 1024)))

    out_sds = jax.ShapeDtypeStruct((B, B), jnp.float32)
    in_map = lambda k: (0, k)
    out_map = lambda k: (0, 0)

    xx, yy, xy = pl.pallas_call(
        functools.partial(_gram_kernel, d_rem=d_rem),
        out_shape=(out_sds, out_sds, out_sds),
        grid_spec=pltpu.PrefetchScalarGridSpec(
            num_scalar_prefetch=0,
            grid=(ksteps,),
            in_specs=[pl.BlockSpec((B, tk), in_map),
                      pl.BlockSpec((B, tk), in_map)],
            out_specs=(pl.BlockSpec((B, B), out_map),
                       pl.BlockSpec((B, B), out_map),
                       pl.BlockSpec((B, B), out_map))),
        compiler_params=pltpu.CompilerParams(
            dimension_semantics=("arbitrary",),
            vmem_limit_bytes=vmem_limit),
    )(source, target)

    # Tiny (B, B) nonlinear epilogue stays in plain JAX (per the review).
    return _mmd_from_grams(xx, yy, xy, kernel_type)


def _reference_mmd(source, target, kernel_type='multiscale'):
    """Pure-JAX reference mirroring the PyTorch module, for a sanity check."""
    s = jnp.nan_to_num(source.reshape(source.shape[0], -1).astype(jnp.float32))
    t = jnp.nan_to_num(target.reshape(target.shape[0], -1).astype(jnp.float32))
    xx, yy, xy = s @ s.T, t @ t.T, s @ t.T
    rx = jnp.diag(xx)[None, :]
    ry = jnp.diag(yy)[None, :]
    dxx = rx.T + rx - 2 * xx
    dyy = ry.T + ry - 2 * yy
    dxy = rx.T + ry - 2 * xy
    XX = jnp.zeros_like(xx)
    YY = jnp.zeros_like(xx)
    XY = jnp.zeros_like(xx)
    if kernel_type == 'multiscale':
        for a in _MULTISCALE_BW:
            XX = XX + a ** 2 * (a ** 2 + dxx) ** (-1)
            YY = YY + a ** 2 * (a ** 2 + dyy) ** (-1)
            XY = XY + a ** 2 * (a ** 2 + dxy) ** (-1)
    else:
        for a in _RBF_BW:
            XX = XX + jnp.exp(-0.5 * dxx / a)
            YY = YY + jnp.exp(-0.5 * dyy / a)
            XY = XY + jnp.exp(-0.5 * dxy / a)
    return jnp.mean(XX + YY - 2 * XY) * 0.1


if __name__ == "__main__":
    key = jax.random.PRNGKey(0)
    k1, k2 = jax.random.split(key)

    # Small conv-feature-like inputs: NCHW = (2, 4, 16, 16) -> flattened D=1024.
    source = jax.random.normal(k1, (2, 4, 16, 16), dtype=jnp.float32)
    target = jax.random.normal(k2, (2, 4, 16, 16), dtype=jnp.float32) * 1.5 + 0.3
    # Inject a NaN to exercise the in-kernel nan_to_num handling.
    source = source.at[0, 0, 0, 0].set(jnp.nan)

    # Default tiling: one large lane-dense step (D=1024 fits VMEM trivially).
    loss_ms = jax.block_until_ready(
        simplified_mmd_loss(source, target, kernel_type='multiscale'))
    # Forced small block (block_k=384): exercises the multi-step reduction grid
    # AND the in-kernel ragged-tail mask (1024 % 384 = 256) with zero padding.
    loss_ms_tiled = jax.block_until_ready(
        simplified_mmd_loss(source, target, kernel_type='multiscale', block_k=384))
    loss_rbf = jax.block_until_ready(
        simplified_mmd_loss(source, target, kernel_type='rbf', block_k=256))

    ref_ms = _reference_mmd(source, target, 'multiscale')
    ref_rbf = _reference_mmd(source, target, 'rbf')
    assert jnp.allclose(loss_ms, ref_ms, rtol=1e-4, atol=1e-6), (loss_ms, ref_ms)
    assert jnp.allclose(loss_ms_tiled, ref_ms, rtol=1e-4, atol=1e-6), (loss_ms_tiled, ref_ms)
    assert jnp.allclose(loss_rbf, ref_rbf, rtol=1e-4, atol=1e-6), (loss_rbf, ref_rbf)

    print("KERNEL_OK")
</pallas_src>

<mosaic_0001>
module attributes {stable_mosaic.version = 11 : i64} {
  func.func @_gram_kernel(%arg0: i32, %arg1: memref<2x1024xf32, #tpu.memory_space<vmem>>, %arg2: memref<2x1024xf32, #tpu.memory_space<vmem>>, %arg3: memref<2x2xf32, #tpu.memory_space<vmem>>, %arg4: memref<2x2xf32, #tpu.memory_space<vmem>>, %arg5: memref<2x2xf32, #tpu.memory_space<vmem>>) attributes {dimension_semantics = [#tpu.dimension_semantics<arbitrary>], iteration_bounds = array<i64: 1>, scalar_prefetch = 0 : i64, scratch_operands = 0 : i64, tpu.core_type = #tpu.core_type<tc>, window_params = [{transform_indices = @transform_0, window_bounds = array<i64: 2, 1024>}, {transform_indices = @transform_1, window_bounds = array<i64: 2, 1024>}, {pipeline_mode = #tpu.pipeline_mode<synchronous>, transform_indices = @transform_2, window_bounds = array<i64: 2, 2>}, {pipeline_mode = #tpu.pipeline_mode<synchronous>, transform_indices = @transform_3, window_bounds = array<i64: 2, 2>}, {pipeline_mode = #tpu.pipeline_mode<synchronous>, transform_indices = @transform_4, window_bounds = array<i64: 2, 2>}]} {
    %c0_i32 = arith.constant 0 : i32
    %0 = arith.cmpi eq, %arg0, %c0_i32 : i32
    %1 = arith.extui %0 : i1 to i32
    %c0_i32_0 = arith.constant 0 : i32
    %2 = arith.cmpi ne, %1, %c0_i32_0 : i32
    scf.if %2 {
      %cst_28 = arith.constant 0.000000e+00 : f32
      %39 = vector.broadcast %cst_28 : f32 to vector<2x2xf32>
      %c0_29 = arith.constant 0 : index
      %c0_30 = arith.constant 0 : index
      %40 = vector.load %arg3[%c0_29, %c0_30] : memref<2x2xf32, #tpu.memory_space<vmem>>, vector<2x2xf32>
      tpu.vector_store %arg3[%c0_29, %c0_30], %39 {strides = array<i32>} : memref<2x2xf32, #tpu.memory_space<vmem>>, vector<2x2xf32>,
      %cst_31 = arith.constant 0.000000e+00 : f32
      %41 = vector.broadcast %cst_31 : f32 to vector<2x2xf32>
      %c0_32 = arith.constant 0 : index
      %c0_33 = arith.constant 0 : index
      %42 = vector.load %arg4[%c0_32, %c0_33] : memref<2x2xf32, #tpu.memory_space<vmem>>, vector<2x2xf32>
      tpu.vector_store %arg4[%c0_32, %c0_33], %41 {strides = array<i32>} : memref<2x2xf32, #tpu.memory_space<vmem>>, vector<2x2xf32>,
      %cst_34 = arith.constant 0.000000e+00 : f32
      %43 = vector.broadcast %cst_34 : f32 to vector<2x2xf32>
      %c0_35 = arith.constant 0 : index
      %c0_36 = arith.constant 0 : index
      %44 = vector.load %arg5[%c0_35, %c0_36] : memref<2x2xf32, #tpu.memory_space<vmem>>, vector<2x2xf32>
      tpu.vector_store %arg5[%c0_35, %c0_36], %43 {strides = array<i32>} : memref<2x2xf32, #tpu.memory_space<vmem>>, vector<2x2xf32>,
    } else {
    }
    %c0 = arith.constant 0 : index
    %c0_1 = arith.constant 0 : index
    %3 = vector.load %arg1[%c0, %c0_1] : memref<2x1024xf32, #tpu.memory_space<vmem>>, vector<2x1024xf32>
    %c0_2 = arith.constant 0 : index
    %c0_3 = arith.constant 0 : index
    %4 = vector.load %arg2[%c0_2, %c0_3] : memref<2x1024xf32, #tpu.memory_space<vmem>>, vector<2x1024xf32>
    %5 = arith.cmpf one, %3, %3 : vector<2x1024xf32>
    %cst = arith.constant 0.000000e+00 : f32
    %6 = vector.broadcast %cst : f32 to vector<2x1024xf32>
    %7 = arith.select %5, %6, %3 : vector<2x1024xi1>, vector<2x1024xf32>
    %cst_4 = arith.constant 0x7F800000 : f32
    %8 = vector.broadcast %cst_4 : f32 to vector<2x1024xf32>
    %9 = arith.cmpf oeq, %7, %8 : vector<2x1024xf32>
    %cst_5 = arith.constant 3.40282347E+38 : f32
    %10 = vector.broadcast %cst_5 : f32 to vector<2x1024xf32>
    %11 = arith.select %9, %10, %7 : vector<2x1024xi1>, vector<2x1024xf32>
    %cst_6 = arith.constant 0xFF800000 : f32
    %12 = vector.broadcast %cst_6 : f32 to vector<2x1024xf32>
    %13 = arith.cmpf oeq, %11, %12 : vector<2x1024xf32>
    %cst_7 = arith.constant -3.40282347E+38 : f32
    %14 = vector.broadcast %cst_7 : f32 to vector<2x1024xf32>
    %15 = arith.select %13, %14, %11 : vector<2x1024xi1>, vector<2x1024xf32>
    %16 = arith.cmpf one, %4, %4 : vector<2x1024xf32>
    %cst_8 = arith.constant 0.000000e+00 : f32
    %17 = vector.broadcast %cst_8 : f32 to vector<2x1024xf32>
    %18 = arith.select %16, %17, %4 : vector<2x1024xi1>, vector<2x1024xf32>
    %cst_9 = arith.constant 0x7F800000 : f32
    %19 = vector.broadcast %cst_9 : f32 to vector<2x1024xf32>
    %20 = arith.cmpf oeq, %18, %19 : vector<2x1024xf32>
    %cst_10 = arith.constant 3.40282347E+38 : f32
    %21 = vector.broadcast %cst_10 : f32 to vector<2x1024xf32>
    %22 = arith.select %20, %21, %18 : vector<2x1024xi1>, vector<2x1024xf32>
    %cst_11 = arith.constant 0xFF800000 : f32
    %23 = vector.broadcast %cst_11 : f32 to vector<2x1024xf32>
    %24 = arith.cmpf oeq, %22, %23 : vector<2x1024xf32>
    %cst_12 = arith.constant -3.40282347E+38 : f32
    %25 = vector.broadcast %cst_12 : f32 to vector<2x1024xf32>
    %26 = arith.select %24, %25, %22 : vector<2x1024xi1>, vector<2x1024xf32>
    %c0_13 = arith.constant 0 : index
    %c0_14 = arith.constant 0 : index
    %27 = vector.load %arg3[%c0_13, %c0_14] : memref<2x2xf32, #tpu.memory_space<vmem>>, vector<2x2xf32>
    %cst_15 = arith.constant dense<0.000000e+00> : vector<2x2xf32>
    %28 = tpu.matmul %15, %15, %cst_15 {dimension_numbers = #tpu.dot_dimension_numbers<[1], [1], [0], [0], [0, 0, 1, 0], [], []>} : vector<2x1024xf32>, vector<2x1024xf32>, vector<2x2xf32> -> vector<2x2xf32>
    %29 = arith.addf %27, %28 : vector<2x2xf32>
    %c0_16 = arith.constant 0 : index
    %c0_17 = arith.constant 0 : index
    %30 = vector.load %arg3[%c0_16, %c0_17] : memref<2x2xf32, #tpu.memory_space<vmem>>, vector<2x2xf32>
    tpu.vector_store %arg3[%c0_16, %c0_17], %29 {strides = array<i32>} : memref<2x2xf32, #tpu.memory_space<vmem>>, vector<2x2xf32>,
    %c0_18 = arith.constant 0 : index
    %c0_19 = arith.constant 0 : index
    %31 = vector.load %arg4[%c0_18, %c0_19] : memref<2x2xf32, #tpu.memory_space<vmem>>, vector<2x2xf32>
    %cst_20 = arith.constant dense<0.000000e+00> : vector<2x2xf32>
    %32 = tpu.matmul %26, %26, %cst_20 {dimension_numbers = #tpu.dot_dimension_numbers<[1], [1], [0], [0], [0, 0, 1, 0], [], []>} : vector<2x1024xf32>, vector<2x1024xf32>, vector<2x2xf32> -> vector<2x2xf32>
    %33 = arith.addf %31, %32 : vector<2x2xf32>
    %c0_21 = arith.constant 0 : index
    %c0_22 = arith.constant 0 : index
    %34 = vector.load %arg4[%c0_21, %c0_22] : memref<2x2xf32, #tpu.memory_space<vmem>>, vector<2x2xf32>
    tpu.vector_store %arg4[%c0_21, %c0_22], %33 {strides = array<i32>} : memref<2x2xf32, #tpu.memory_space<vmem>>, vector<2x2xf32>,
    %c0_23 = arith.constant 0 : index
    %c0_24 = arith.constant 0 : index
    %35 = vector.load %arg5[%c0_23, %c0_24] : memref<2x2xf32, #tpu.memory_space<vmem>>, vector<2x2xf32>
    %cst_25 = arith.constant dense<0.000000e+00> : vector<2x2xf32>
    %36 = tpu.matmul %15, %26, %cst_25 {dimension_numbers = #tpu.dot_dimension_numbers<[1], [1], [0], [0], [0, 0, 1, 0], [], []>} : vector<2x1024xf32>, vector<2x1024xf32>, vector<2x2xf32> -> vector<2x2xf32>
    %37 = arith.addf %35, %36 : vector<2x2xf32>
    %c0_26 = arith.constant 0 : index
    %c0_27 = arith.constant 0 : index
    %38 = vector.load %arg5[%c0_26, %c0_27] : memref<2x2xf32, #tpu.memory_space<vmem>>, vector<2x2xf32>
    tpu.vector_store %arg5[%c0_26, %c0_27], %37 {strides = array<i32>} : memref<2x2xf32, #tpu.memory_space<vmem>>, vector<2x2xf32>,
    return
  }
  func.func @transform_0(%arg0: i32) -> (i32, i32) {
    %c0_i32 = arith.constant 0 : i32
    %c0_i32_0 = arith.constant 0 : i32
    return %c0_i32, %arg0 : i32, i32
  }
  func.func @transform_1(%arg0: i32) -> (i32, i32) {
    %c0_i32 = arith.constant 0 : i32
    %c0_i32_0 = arith.constant 0 : i32
    return %c0_i32, %arg0 : i32, i32
  }
  func.func @transform_2(%arg0: i32) -> (i32, i32) {
    %c0_i32 = arith.constant 0 : i32
    %c0_i32_0 = arith.constant 0 : i32
    %c0_i32_1 = arith.constant 0 : i32
    return %c0_i32, %c0_i32_0 : i32, i32
  }
  func.func @transform_3(%arg0: i32) -> (i32, i32) {
    %c0_i32 = arith.constant 0 : i32
    %c0_i32_0 = arith.constant 0 : i32
    %c0_i32_1 = arith.constant 0 : i32
    return %c0_i32, %c0_i32_0 : i32, i32
  }
  func.func @transform_4(%arg0: i32) -> (i32, i32) {
    %c0_i32 = arith.constant 0 : i32
    %c0_i32_0 = arith.constant 0 : i32
    %c0_i32_1 = arith.constant 0 : i32
    return %c0_i32, %c0_i32_0 : i32, i32
  }
}

</mosaic_0001>

<llo_original>
// kernel: simplified_mmd_loss.1
$region0: #{simplified_mmd_loss.1}
  #allocation0 [shape = 'u32[]', space=smem, size = 0x4, offset = 0x4, fixed_abs, tag = 'smem constant byte address 0x4 - core index']
  #allocation1 [shape = 'u32[72,128]{1,0:T(1,128)}', space=vmem, size = 0x9000, scoped, tag = 'internal scratch']
  %s0 = inlined_call_operand.vmem [shape: f32[2,1024], index: 0, kind: input, shape index: {}]
  %s1 = inlined_call_operand.vmem [shape: f32[2,1024], index: 1, kind: input, shape index: {}]
  %s2 = inlined_call_operand.vmem [shape: f32[2,2], index: 2, kind: output, shape index: {0}]
  %s3 = inlined_call_operand.vmem [shape: f32[2,2], index: 3, kind: output, shape index: {1}]
  %s4 = inlined_call_operand.vmem [shape: f32[2,2], index: 4, kind: output, shape index: {2}]
  %5 = xla_tuple %s2, %s3, %s4
  %s6 = sld [smem:[#allocation0]]
  $region38: #{simplified_mmd_loss.1} parent=0
    _
  %s8 = ssub.s32 1, %s6
  %s9 = scalar_select 0, %s8, %s6
  // Predicated region
  $region2: #{simplified_mmd_loss.1} parent=0 // pred_check
    _
  $region3: #{simplified_mmd_loss.1} parent=0 // pred_check_branch
    %11 = sbr.rel (0) target = $region5
  $region4: #{simplified_mmd_loss.1} parent=0 // pred_region
    _
  $region5: #{simplified_mmd_loss.1} parent=0 // pred_fallthru
    _
  // Predicated region
  $region6: #{simplified_mmd_loss.1} parent=0 // pred_check
    _
  $region7: #{simplified_mmd_loss.1} parent=0 // pred_check_branch
    %13 = sbr.rel (0) target = $region9
  $region8: #{simplified_mmd_loss.1} parent=0 // pred_region
    _
  $region9: #{simplified_mmd_loss.1} parent=0 // pred_fallthru
    _
  %p14 = scmp.eq.s32.totalorder 0, 0
  // Predicated region
  $region10: #{simplified_mmd_loss.1} parent=0 // pred_check
    %p15 = pneg %p14
  $region11: #{simplified_mmd_loss.1} parent=0 // pred_check_branch
    %17 = sbr.rel (%p15) target = $region13
  $region12: #{simplified_mmd_loss.1} parent=0 // pred_region
    %vm18 = vcmask 9216
    %19 = vst.msk [vmem:[%s2] sm:$0x3] %vm18, 0.0
    %20 = vst.msk [vmem:[%s3] sm:$0x3] %vm18, 0.0
    %21 = vst.msk [vmem:[%s4] sm:$0x3] %vm18, 0.0
  $region13: #{simplified_mmd_loss.1} parent=0 // pred_fallthru
    _
  %v22 = vld [vmem:[%s0] sm:$0xff]
  %v23 = vld [vmem:[%s0 + $0x8] sm:$0xff]
  %v24 = vld [vmem:[%s1] sm:$0xff]
  %v25 = vld [vmem:[%s1 + $0x8] sm:$0xff]
  %vm26 = vcmp.ne.f32.partialorder %v22, %v22
  %vm27 = vcmp.ne.f32.partialorder %v23, %v23
  %v28 = vsel %vm26, 0.0, %v22
  %v29 = vsel %vm27, 0.0, %v23
  %vm30 = vcmp.eq.f32.partialorder %v28, inf
  %vm31 = vcmp.eq.f32.partialorder %v29, inf
  %v32 = vsel %vm30, 3.4028235e+38, %v28
  %v33 = vsel %vm31, 3.4028235e+38, %v29
  %vm34 = vcmp.eq.f32.partialorder %v32, -inf
  %vm35 = vcmp.eq.f32.partialorder %v33, -inf
  %v36 = vsel %vm34, -3.4028235e+38, %v32
  %v37 = vsel %vm35, -3.4028235e+38, %v33
  %vm38 = vcmp.ne.f32.partialorder %v24, %v24
  %vm39 = vcmp.ne.f32.partialorder %v25, %v25
  %v40 = vsel %vm38, 0.0, %v24
  %v41 = vsel %vm39, 0.0, %v25
  %vm42 = vcmp.eq.f32.partialorder %v40, inf
  %vm43 = vcmp.eq.f32.partialorder %v41, inf
  %v44 = vsel %vm42, 3.4028235e+38, %v40
  %v45 = vsel %vm43, 3.4028235e+38, %v41
  %vm46 = vcmp.eq.f32.partialorder %v44, -inf
  %vm47 = vcmp.eq.f32.partialorder %v45, -inf
  %v48 = vsel %vm46, -3.4028235e+38, %v44
  %v49 = vsel %vm47, -3.4028235e+38, %v45
  %v50 = vld [vmem:[%s2] sm:$0x3]
  %53 = vst [vmem:[#allocation1] ss:$4 sm:$0xff] %v36
  %s54 = scalar_lea.vmem [#allocation1], 32
  %55 = vst [vmem:[%s54] ss:$4 sm:$0xff] %v37
  %v56 = vld.sshfl [vmem:[#allocation1] sm:$0xff pattern:$0x73625140]
  %v57 = vld.sshfl [vmem:[#allocation1 + $0x8] sm:$0xff pattern:$0x73625140]
  %v58 = vld.sshfl [vmem:[#allocation1 + $0x10] sm:$0xff pattern:$0x73625140]
  %v59 = vld.sshfl [vmem:[#allocation1 + $0x18] sm:$0xff pattern:$0x73625140]
  %v60 = vld.sshfl [vmem:[#allocation1 + $0x20] sm:$0xff pattern:$0x73625140]
  %v61 = vld.sshfl [vmem:[#allocation1 + $0x28] sm:$0xff pattern:$0x73625140]
  %v62 = vld.sshfl [vmem:[#allocation1 + $0x30] sm:$0xff pattern:$0x73625140]
  %v63 = vld.sshfl [vmem:[#allocation1 + $0x38] sm:$0xff pattern:$0x73625140]
  %72 = vst [vmem:[#allocation1] ss:$4 sm:$0xff] %v36
  %s73 = scalar_lea.vmem [#allocation1], 32
  %74 = vst [vmem:[%s73] ss:$4 sm:$0xff] %v37
  %v75 = vld.sshfl [vmem:[#allocation1] sm:$0xff pattern:$0x73625140]
  %v76 = vld.sshfl [vmem:[#allocation1 + $0x8] sm:$0xff pattern:$0x73625140]
  %v77 = vld.sshfl [vmem:[#allocation1 + $0x10] sm:$0xff pattern:$0x73625140]
  %v78 = vld.sshfl [vmem:[#allocation1 + $0x18] sm:$0xff pattern:$0x73625140]
  %v79 = vld.sshfl [vmem:[#allocation1 + $0x20] sm:$0xff pattern:$0x73625140]
  %v80 = vld.sshfl [vmem:[#allocation1 + $0x28] sm:$0xff pattern:$0x73625140]
  %v81 = vld.sshfl [vmem:[#allocation1 + $0x30] sm:$0xff pattern:$0x73625140]
  %v82 = vld.sshfl [vmem:[#allocation1 + $0x38] sm:$0xff pattern:$0x73625140]
  %91 = vmatpush.xpose.msra.mxu0 0.0
  %92 = vmatpush.xpose.msra.mxu0 0.0
  %93 = vmatpush.xpose.msra.mxu0 0.0
  %94 = vmatpush.xpose.msra.mxu0 0.0
  %95 = vmatpush.xpose.msra.mxu0 0.0
  %96 = vmatpush.xpose.msra.mxu0 0.0
  %97 = vmatpush.xpose.msra.mxu0 0.0
  %98 = vmatpush.xpose.msra.mxu0 0.0
  %99 = vmatpush.xpose.msra.mxu0 0.0
  %100 = vmatpush.xpose.msra.mxu0 0.0
  %101 = vmatpush.xpose.msra.mxu0 0.0
  %102 = vmatpush.xpose.msra.mxu0 0.0
  %103 = vmatpush.xpose.msra.mxu0 0.0
  %104 = vmatpush.xpose.msra.mxu0 0.0
  %105 = vmatpush.xpose.msra.mxu0 0.0
  %106 = vmatpush.xpose.msra.mxu0 %v75
  %107 = vmatmul.f32.gmra.mxu0 %v56
  %v108 = vpop.f32.mrf.mxu0
  %v109 = vadd.f32 0.0, %v108
  %110 = vdwg.mxu0
  %111 = vmatpush.xpose.msra.mxu0 0.0
  %112 = vmatpush.xpose.msra.mxu0 0.0
  %113 = vmatpush.xpose.msra.mxu0 0.0
  %114 = vmatpush.xpose.msra.mxu0 0.0
  %115 = vmatpush.xpose.msra.mxu0 0.0
  %116 = vmatpush.xpose.msra.mxu0 0.0
  %117 = vmatpush.xpose.msra.mxu0 0.0
  %118 = vmatpush.xpose.msra.mxu0 0.0
  %119 = vmatpush.xpose.msra.mxu0 0.0
  %120 = vmatpush.xpose.msra.mxu0 0.0
  %121 = vmatpush.xpose.msra.mxu0 0.0
  %122 = vmatpush.xpose.msra.mxu0 0.0
  %123 = vmatpush.xpose.msra.mxu0 0.0
  %124 = vmatpush.xpose.msra.mxu0 0.0
  %125 = vmatpush.xpose.msra.mxu0 0.0
  %126 = vmatpush.xpose.msra.mxu0 %v76
  %127 = vmatmul.f32.gmra.mxu0 %v57
  %v128 = vpop.f32.mrf.mxu0
  %v129 = vadd.f32 %v109, %v128
  %130 = vdwg.mxu0
  %131 = vmatpush.xpose.msra.mxu0 0.0
  %132 = vmatpush.xpose.msra.mxu0 0.0
  %133 = vmatpush.xpose.msra.mxu0 0.0
  %134 = vmatpush.xpose.msra.mxu0 0.0
  %135 = vmatpush.xpose.msra.mxu0 0.0
  %136 = vmatpush.xpose.msra.mxu0 0.0
  %137 = vmatpush.xpose.msra.mxu0 0.0
  %138 = vmatpush.xpose.msra.mxu0 0.0
  %139 = vmatpush.xpose.msra.mxu0 0.0
  %140 = vmatpush.xpose.msra.mxu0 0.0
  %141 = vmatpush.xpose.msra.mxu0 0.0
  %142 = vmatpush.xpose.msra.mxu0 0.0
  %143 = vmatpush.xpose.msra.mxu0 0.0
  %144 = vmatpush.xpose.msra.mxu0 0.0
  %145 = vmatpush.xpose.msra.mxu0 0.0
  %146 = vmatpush.xpose.msra.mxu0 %v77
  %147 = vmatmul.f32.gmra.mxu0 %v58
  %v148 = vpop.f32.mrf.mxu0
  %v149 = vadd.f32 %v129, %v148
  %150 = vdwg.mxu0
  %151 = vmatpush.xpose.msra.mxu0 0.0
  %152 = vmatpush.xpose.msra.mxu0 0.0
  %153 = vmatpush.xpose.msra.mxu0 0.0
  %154 = vmatpush.xpose.msra.mxu0 0.0
  %155 = vmatpush.xpose.msra.mxu0 0.0
  %156 = vmatpush.xpose.msra.mxu0 0.0
  %157 = vmatpush.xpose.msra.mxu0 0.0
  %158 = vmatpush.xpose.msra.mxu0 0.0
  %159 = vmatpush.xpose.msra.mxu0 0.0
  %160 = vmatpush.xpose.msra.mxu0 0.0
  %161 = vmatpush.xpose.msra.mxu0 0.0
  %162 = vmatpush.xpose.msra.mxu0 0.0
  %163 = vmatpush.xpose.msra.mxu0 0.0
  %164 = vmatpush.xpose.msra.mxu0 0.0
  %165 = vmatpush.xpose.msra.mxu0 0.0
  %166 = vmatpush.xpose.msra.mxu0 %v78
  %167 = vmatmul.f32.gmra.mxu0 %v59
  %v168 = vpop.f32.mrf.mxu0
  %v169 = vadd.f32 %v149, %v168
  %170 = vdwg.mxu0
  %171 = vmatpush.xpose.msra.mxu0 0.0
  %172 = vmatpush.xpose.msra.mxu0 0.0
  %173 = vmatpush.xpose.msra.mxu0 0.0
  %174 = vmatpush.xpose.msra.mxu0 0.0
  %175 = vmatpush.xpose.msra.mxu0 0.0
  %176 = vmatpush.xpose.msra.mxu0 0.0
  %177 = vmatpush.xpose.msra.mxu0 0.0
  %178 = vmatpush.xpose.msra.mxu0 0.0
  %179 = vmatpush.xpose.msra.mxu0 0.0
  %180 = vmatpush.xpose.msra.mxu0 0.0
  %181 = vmatpush.xpose.msra.mxu0 0.0
  %182 = vmatpush.xpose.msra.mxu0 0.0
  %183 = vmatpush.xpose.msra.mxu0 0.0
  %184 = vmatpush.xpose.msra.mxu0 0.0
  %185 = vmatpush.xpose.msra.mxu0 0.0
  %186 = vmatpush.xpose.msra.mxu0 %v79
  %187 = vmatmul.f32.gmra.mxu0 %v60
  %v188 = vpop.f32.mrf.mxu0
  %v189 = vadd.f32 %v169, %v188
  %190 = vdwg.mxu0
  %191 = vmatpush.xpose.msra.mxu0 0.0
  %192 = vmatpush.xpose.msra.mxu0 0.0
  %193 = vmatpush.xpose.msra.mxu0 0.0
  %194 = vmatpush.xpose.msra.mxu0 0.0
  %195 = vmatpush.xpose.msra.mxu0 0.0
  %196 = vmatpush.xpose.msra.mxu0 0.0
  %197 = vmatpush.xpose.msra.mxu0 0.0
  %198 = vmatpush.xpose.msra.mxu0 0.0
  %199 = vmatpush.xpose.msra.mxu0 0.0
  %200 = vmatpush.xpose.msra.mxu0 0.0
  %201 = vmatpush.xpose.msra.mxu0 0.0
  %202 = vmatpush.xpose.msra.mxu0 0.0
  %203 = vmatpush.xpose.msra.mxu0 0.0
  %204 = vmatpush.xpose.msra.mxu0 0.0
  %205 = vmatpush.xpose.msra.mxu0 0.0
  %206 = vmatpush.xpose.msra.mxu0 %v80
  %207 = vmatmul.f32.gmra.mxu0 %v61
  %v208 = vpop.f32.mrf.mxu0
  %v209 = vadd.f32 %v189, %v208
  %210 = vdwg.mxu0
  %211 = vmatpush.xpose.msra.mxu0 0.0
  %212 = vmatpush.xpose.msra.mxu0 0.0
  %213 = vmatpush.xpose.msra.mxu0 0.0
  %214 = vmatpush.xpose.msra.mxu0 0.0
  %215 = vmatpush.xpose.msra.mxu0 0.0
  %216 = vmatpush.xpose.msra.mxu0 0.0
  %217 = vmatpush.xpose.msra.mxu0 0.0
  %218 = vmatpush.xpose.msra.mxu0 0.0
  %219 = vmatpush.xpose.msra.mxu0 0.0
  %220 = vmatpush.xpose.msra.mxu0 0.0
  %221 = vmatpush.xpose.msra.mxu0 0.0
  %222 = vmatpush.xpose.msra.mxu0 0.0
  %223 = vmatpush.xpose.msra.mxu0 0.0
  %224 = vmatpush.xpose.msra.mxu0 0.0
  %225 = vmatpush.xpose.msra.mxu0 0.0
  %226 = vmatpush.xpose.msra.mxu0 %v81
  %227 = vmatmul.f32.gmra.mxu0 %v62
  %v228 = vpop.f32.mrf.mxu0
  %v229 = vadd.f32 %v209, %v228
  %230 = vdwg.mxu0
  %231 = vmatpush.xpose.msra.mxu0 0.0
  %232 = vmatpush.xpose.msra.mxu0 0.0
  %233 = vmatpush.xpose.msra.mxu0 0.0
  %234 = vmatpush.xpose.msra.mxu0 0.0
  %235 = vmatpush.xpose.msra.mxu0 0.0
  %236 = vmatpush.xpose.msra.mxu0 0.0
  %237 = vmatpush.xpose.msra.mxu0 0.0
  %238 = vmatpush.xpose.msra.mxu0 0.0
  %239 = vmatpush.xpose.msra.mxu0 0.0
  %240 = vmatpush.xpose.msra.mxu0 0.0
  %241 = vmatpush.xpose.msra.mxu0 0.0
  %242 = vmatpush.xpose.msra.mxu0 0.0
  %243 = vmatpush.xpose.msra.mxu0 0.0
  %244 = vmatpush.xpose.msra.mxu0 0.0
  %245 = vmatpush.xpose.msra.mxu0 0.0
  %246 = vmatpush.xpose.msra.mxu0 %v82
  %247 = vmatmul.f32.gmra.mxu0 %v63
  %v248 = vpop.f32.mrf.mxu0
  %v249 = vadd.f32 %v229, %v248
  %250 = vdwg.mxu0
  %v251 = vadd.f32 %v50, %v249
  %vm252 = vcmask 9216
  %253 = vst.msk [vmem:[%s2] sm:$0x3] %vm252, %v251
  %v254 = vld [vmem:[%s3] sm:$0x3]
  %257 = vst [vmem:[#allocation1] ss:$4 sm:$0xff] %v48
  %s258 = scalar_lea.vmem [#allocation1], 32
  %259 = vst [vmem:[%s258] ss:$4 sm:$0xff] %v49
  %v260 = vld.sshfl [vmem:[#allocation1] sm:$0xff pattern:$0x73625140]
  %v261 = vld.sshfl [vmem:[#allocation1 + $0x8] sm:$0xff pattern:$0x73625140]
  %v262 = vld.sshfl [vmem:[#allocation1 + $0x10] sm:$0xff pattern:$0x73625140]
  %v263 = vld.sshfl [vmem:[#allocation1 + $0x18] sm:$0xff pattern:$0x73625140]
  %v264 = vld.sshfl [vmem:[#allocation1 + $0x20] sm:$0xff pattern:$0x73625140]
  %v265 = vld.sshfl [vmem:[#allocation1 + $0x28] sm:$0xff pattern:$0x73625140]
  %v266 = vld.sshfl [vmem:[#allocation1 + $0x30] sm:$0xff pattern:$0x73625140]
  %v267 = vld.sshfl [vmem:[#allocation1 + $0x38] sm:$0xff pattern:$0x73625140]
  %276 = vst [vmem:[#allocation1] ss:$4 sm:$0xff] %v48
  %s277 = scalar_lea.vmem [#allocation1], 32
  %278 = vst [vmem:[%s277] ss:$4 sm:$0xff] %v49
  %v279 = vld.sshfl [vmem:[#allocation1] sm:$0xff pattern:$0x73625140]
  %v280 = vld.sshfl [vmem:[#allocation1 + $0x8] sm:$0xff pattern:$0x73625140]
  %v281 = vld.sshfl [vmem:[#allocation1 + $0x10] sm:$0xff pattern:$0x73625140]
  %v282 = vld.sshfl [vmem:[#allocation1 + $0x18] sm:$0xff pattern:$0x73625140]
  %v283 = vld.sshfl [vmem:[#allocation1 + $0x20] sm:$0xff pattern:$0x73625140]
  %v284 = vld.sshfl [vmem:[#allocation1 + $0x28] sm:$0xff pattern:$0x73625140]
  %v285 = vld.sshfl [vmem:[#allocation1 + $0x30] sm:$0xff pattern:$0x73625140]
  %v286 = vld.sshfl [vmem:[#allocation1 + $0x38] sm:$0xff pattern:$0x73625140]
  %295 = vmatpush.xpose.msra.mxu0 0.0
  %296 = vmatpush.xpose.msra.mxu0 0.0
  %297 = vmatpush.xpose.msra.mxu0 0.0
  %298 = vmatpush.xpose.msra.mxu0 0.0
  %299 = vmatpush.xpose.msra.mxu0 0.0
  %300 = vmatpush.xpose.msra.mxu0 0.0
  %301 = vmatpush.xpose.msra.mxu0 0.0
  %302 = vmatpush.xpose.msra.mxu0 0.0
  %303 = vmatpush.xpose.msra.mxu0 0.0
  %304 = vmatpush.xpose.msra.mxu0 0.0
  %305 = vmatpush.xpose.msra.mxu0 0.0
  %306 = vmatpush.xpose.msra.mxu0 0.0
  %307 = vmatpush.xpose.msra.mxu0 0.0
  %308 = vmatpush.xpose.msra.mxu0 0.0
  %309 = vmatpush.xpose.msra.mxu0 0.0
  %310 = vmatpush.xpose.msra.mxu0 %v279
  %311 = vmatmul.f32.gmra.mxu0 %v260
  %v312 = vpop.f32.mrf.mxu0
  %v313 = vadd.f32 0.0, %v312
  %314 = vdwg.mxu0
  %315 = vmatpush.xpose.msra.mxu0 0.0
  %316 = vmatpush.xpose.msra.mxu0 0.0
  %317 = vmatpush.xpose.msra.mxu0 0.0
  %318 = vmatpush.xpose.msra.mxu0 0.0
  %319 = vmatpush.xpose.msra.mxu0 0.0
  %320 = vmatpush.xpose.msra.mxu0 0.0
  %321 = vmatpush.xpose.msra.mxu0 0.0
  %322 = vmatpush.xpose.msra.mxu0 0.0
  %323 = vmatpush.xpose.msra.mxu0 0.0
  %324 = vmatpush.xpose.msra.mxu0 0.0
  %325 = vmatpush.xpose.msra.mxu0 0.0
  %326 = vmatpush.xpose.msra.mxu0 0.0
  %327 = vmatpush.xpose.msra.mxu0 0.0
  %328 = vmatpush.xpose.msra.mxu0 0.0
  %329 = vmatpush.xpose.msra.mxu0 0.0
  %330 = vmatpush.xpose.msra.mxu0 %v280
  %331 = vmatmul.f32.gmra.mxu0 %v261
  %v332 = vpop.f32.mrf.mxu0
  %v333 = vadd.f32 %v313, %v332
  %334 = vdwg.mxu0
  %335 = vmatpush.xpose.msra.mxu0 0.0
  %336 = vmatpush.xpose.msra.mxu0 0.0
  %337 = vmatpush.xpose.msra.mxu0 0.0
  %338 = vmatpush.xpose.msra.mxu0 0.0
  %339 = vmatpush.xpose.msra.mxu0 0.0
  %340 = vmatpush.xpose.msra.mxu0 0.0
  %341 = vmatpush.xpose.msra.mxu0 0.0
  %342 = vmatpush.xpose.msra.mxu0 0.0
  %343 = vmatpush.xpose.msra.mxu0 0.0
  %344 = vmatpush.xpose.msra.mxu0 0.0
  %345 = vmatpush.xpose.msra.mxu0 0.0
  %346 = vmatpush.xpose.msra.mxu0 0.0
  %347 = vmatpush.xpose.msra.mxu0 0.0
  %348 = vmatpush.xpose.msra.mxu0 0.0
  %349 = vmatpush.xpose.msra.mxu0 0.0
  %350 = vmatpush.xpose.msra.mxu0 %v281
  %351 = vmatmul.f32.gmra.mxu0 %v262
  %v352 = vpop.f32.mrf.mxu0
  %v353 = vadd.f32 %v333, %v352
  %354 = vdwg.mxu0
  %355 = vmatpush.xpose.msra.mxu0 0.0
  %356 = vmatpush.xpose.msra.mxu0 0.0
  %357 = vmatpush.xpose.msra.mxu0 0.0
  %358 = vmatpush.xpose.msra.mxu0 0.0
  %359 = vmatpush.xpose.msra.mxu0 0.0
  %360 = vmatpush.xpose.msra.mxu0 0.0
  %361 = vmatpush.xpose.msra.mxu0 0.0
  %362 = vmatpush.xpose.msra.mxu0 0.0
  %363 = vmatpush.xpose.msra.mxu0 0.0
  %364 = vmatpush.xpose.msra.mxu0 0.0
  %365 = vmatpush.xpose.msra.mxu0 0.0
  %366 = vmatpush.xpose.msra.mxu0 0.0
  %367 = vmatpush.xpose.msra.mxu0 0.0
  %368 = vmatpush.xpose.msra.mxu0 0.0
  %369 = vmatpush.xpose.msra.mxu0 0.0
  %370 = vmatpush.xpose.msra.mxu0 %v282
  %371 = vmatmul.f32.gmra.mxu0 %v263
  %v372 = vpop.f32.mrf.mxu0
  %v373 = vadd.f32 %v353, %v372
  %374 = vdwg.mxu0
  %375 = vmatpush.xpose.msra.mxu0 0.0
  %376 = vmatpush.xpose.msra.mxu0 0.0
  %377 = vmatpush.xpose.msra.mxu0 0.0
  %378 = vmatpush.xpose.msra.mxu0 0.0
  %379 = vmatpush.xpose.msra.mxu0 0.0
  %380 = vmatpush.xpose.msra.mxu0 0.0
  %381 = vmatpush.xpose.msra.mxu0 0.0
  %382 = vmatpush.xpose.msra.mxu0 0.0
  %383 = vmatpush.xpose.msra.mxu0 0.0
  %384 = vmatpush.xpose.msra.mxu0 0.0
  %385 = vmatpush.xpose.msra.mxu0 0.0
  %386 = vmatpush.xpose.msra.mxu0 0.0
  %387 = vmatpush.xpose.msra.mxu0 0.0
  %388 = vmatpush.xpose.msra.mxu0 0.0
  %389 = vmatpush.xpose.msra.mxu0 0.0
  %390 = vmatpush.xpose.msra.mxu0 %v283
  %391 = vmatmul.f32.gmra.mxu0 %v264
  %v392 = vpop.f32.mrf.mxu0
  %v393 = vadd.f32 %v373, %v392
  %394 = vdwg.mxu0
  %395 = vmatpush.xpose.msra.mxu0 0.0
  %396 = vmatpush.xpose.msra.mxu0 0.0
  %397 = vmatpush.xpose.msra.mxu0 0.0
  %398 = vmatpush.xpose.msra.mxu0 0.0
  %399 = vmatpush.xpose.msra.mxu0 0.0
  %400 = vmatpush.xpose.msra.mxu0 0.0
  %401 = vmatpush.xpose.msra.mxu0 0.0
  %402 = vmatpush.xpose.msra.mxu0 0.0
  %403 = vmatpush.xpose.msra.mxu0 0.0
  %404 = vmatpush.xpose.msra.mxu0 0.0
  %405 = vmatpush.xpose.msra.mxu0 0.0
  %406 = vmatpush.xpose.msra.mxu0 0.0
  %407 = vmatpush.xpose.msra.mxu0 0.0
  %408 = vmatpush.xpose.msra.mxu0 0.0
  %409 = vmatpush.xpose.msra.mxu0 0.0
  %410 = vmatpush.xpose.msra.mxu0 %v284
  %411 = vmatmul.f32.gmra.mxu0 %v265
  %v412 = vpop.f32.mrf.mxu0
  %v413 = vadd.f32 %v393, %v412
  %414 = vdwg.mxu0
  %415 = vmatpush.xpose.msra.mxu0 0.0
  %416 = vmatpush.xpose.msra.mxu0 0.0
  %417 = vmatpush.xpose.msra.mxu0 0.0
  %418 = vmatpush.xpose.msra.mxu0 0.0
  %419 = vmatpush.xpose.msra.mxu0 0.0
  %420 = vmatpush.xpose.msra.mxu0 0.0
  %421 = vmatpush.xpose.msra.mxu0 0.0
  %422 = vmatpush.xpose.msra.mxu0 0.0
  %423 = vmatpush.xpose.msra.mxu0 0.0
  %424 = vmatpush.xpose.msra.mxu0 0.0
  %425 = vmatpush.xpose.msra.mxu0 0.0
  %426 = vmatpush.xpose.msra.mxu0 0.0
  %427 = vmatpush.xpose.msra.mxu0 0.0
  %428 = vmatpush.xpose.msra.mxu0 0.0
  %429 = vmatpush.xpose.msra.mxu0 0.0
  %430 = vmatpush.xpose.msra.mxu0 %v285
  %431 = vmatmul.f32.gmra.mxu0 %v266
  %v432 = vpop.f32.mrf.mxu0
  %v433 = vadd.f32 %v413, %v432
  %434 = vdwg.mxu0
  %435 = vmatpush.xpose.msra.mxu0 0.0
  %436 = vmatpush.xpose.msra.mxu0 0.0
  %437 = vmatpush.xpose.msra.mxu0 0.0
  %438 = vmatpush.xpose.msra.mxu0 0.0
  %439 = vmatpush.xpose.msra.mxu0 0.0
  %440 = vmatpush.xpose.msra.mxu0 0.0
  %441 = vmatpush.xpose.msra.mxu0 0.0
  %442 = vmatpush.xpose.msra.mxu0 0.0
  %443 = vmatpush.xpose.msra.mxu0 0.0
  %444 = vmatpush.xpose.msra.mxu0 0.0
  %445 = vmatpush.xpose.msra.mxu0 0.0
  %446 = vmatpush.xpose.msra.mxu0 0.0
  %447 = vmatpush.xpose.msra.mxu0 0.0
  %448 = vmatpush.xpose.msra.mxu0 0.0
  %449 = vmatpush.xpose.msra.mxu0 0.0
  %450 = vmatpush.xpose.msra.mxu0 %v286
  %451 = vmatmul.f32.gmra.mxu0 %v267
  %v452 = vpop.f32.mrf.mxu0
  %v453 = vadd.f32 %v433, %v452
  %454 = vdwg.mxu0
  %v455 = vadd.f32 %v254, %v453
  %456 = vst.msk [vmem:[%s3] sm:$0x3] %vm252, %v455
  %v457 = vld [vmem:[%s4] sm:$0x3]
  %458 = vst [vmem:[#allocation1] ss:$4 sm:$0xff] %v36
  %s459 = scalar_lea.vmem [#allocation1], 32
  %460 = vst [vmem:[%s459] ss:$4 sm:$0xff] %v37
  %v461 = vld.sshfl [vmem:[#allocation1] sm:$0xff pattern:$0x73625140]
  %v462 = vld.sshfl [vmem:[#allocation1 + $0x8] sm:$0xff pattern:$0x73625140]
  %v463 = vld.sshfl [vmem:[#allocation1 + $0x10] sm:$0xff pattern:$0x73625140]
  %v464 = vld.sshfl [vmem:[#allocation1 + $0x18] sm:$0xff pattern:$0x73625140]
  %v465 = vld.sshfl [vmem:[#allocation1 + $0x20] sm:$0xff pattern:$0x73625140]
  %v466 = vld.sshfl [vmem:[#allocation1 + $0x28] sm:$0xff pattern:$0x73625140]
  %v467 = vld.sshfl [vmem:[#allocation1 + $0x30] sm:$0xff pattern:$0x73625140]
  %v468 = vld.sshfl [vmem:[#allocation1 + $0x38] sm:$0xff pattern:$0x73625140]
  %477 = vst [vmem:[#allocation1] ss:$4 sm:$0xff] %v48
  %s478 = scalar_lea.vmem [#allocation1], 32
  %479 = vst [vmem:[%s478] ss:$4 sm:$0xff] %v49
  %v480 = vld.sshfl [vmem:[#allocation1] sm:$0xff pattern:$0x73625140]
  %v481 = vld.sshfl [vmem:[#allocation1 + $0x8] sm:$0xff pattern:$0x73625140]
  %v482 = vld.sshfl [vmem:[#allocation1 + $0x10] sm:$0xff pattern:$0x73625140]
  %v483 = vld.sshfl [vmem:[#allocation1 + $0x18] sm:$0xff pattern:$0x73625140]
  %v484 = vld.sshfl [vmem:[#allocation1 + $0x20] sm:$0xff pattern:$0x73625140]
  %v485 = vld.sshfl [vmem:[#allocation1 + $0x28] sm:$0xff pattern:$0x73625140]
  %v486 = vld.sshfl [vmem:[#allocation1 + $0x30] sm:$0xff pattern:$0x73625140]
  %v487 = vld.sshfl [vmem:[#allocation1 + $0x38] sm:$0xff pattern:$0x73625140]
  %496 = vmatpush.xpose.msra.mxu0 0.0
  %497 = vmatpush.xpose.msra.mxu0 0.0
  %498 = vmatpush.xpose.msra.mxu0 0.0
  %499 = vmatpush.xpose.msra.mxu0 0.0
  %500 = vmatpush.xpose.msra.mxu0 0.0
  %501 = vmatpush.xpose.msra.mxu0 0.0
  %502 = vmatpush.xpose.msra.mxu0 0.0
  %503 = vmatpush.xpose.msra.mxu0 0.0
  %504 = vmatpush.xpose.msra.mxu0 0.0
  %505 = vmatpush.xpose.msra.mxu0 0.0
  %506 = vmatpush.xpose.msra.mxu0 0.0
  %507 = vmatpush.xpose.msra.mxu0 0.0
  %508 = vmatpush.xpose.msra.mxu0 0.0
  %509 = vmatpush.xpose.msra.mxu0 0.0
  %510 = vmatpush.xpose.msra.mxu0 0.0
  %511 = vmatpush.xpose.msra.mxu0 %v480
  %512 = vmatmul.f32.gmra.mxu0 %v461
  %v513 = vpop.f32.mrf.mxu0
  %v514 = vadd.f32 0.0, %v513
  %515 = vdwg.mxu0
  %516 = vmatpush.xpose.msra.mxu0 0.0
  %517 = vmatpush.xpose.msra.mxu0 0.0
  %518 = vmatpush.xpose.msra.mxu0 0.0
  %519 = vmatpush.xpose.msra.mxu0 0.0
  %520 = vmatpush.xpose.msra.mxu0 0.0
  %521 = vmatpush.xpose.msra.mxu0 0.0
  %522 = vmatpush.xpose.msra.mxu0 0.0
  %523 = vmatpush.xpose.msra.mxu0 0.0
  %524 = vmatpush.xpose.msra.mxu0 0.0
  %525 = vmatpush.xpose.msra.mxu0 0.0
  %526 = vmatpush.xpose.msra.mxu0 0.0
  %527 = vmatpush.xpose.msra.mxu0 0.0
  %528 = vmatpush.xpose.msra.mxu0 0.0
  %529 = vmatpush.xpose.msra.mxu0 0.0
  %530 = vmatpush.xpose.msra.mxu0 0.0
  %531 = vmatpush.xpose.msra.mxu0 %v481
  %532 = vmatmul.f32.gmra.mxu0 %v462
  %v533 = vpop.f32.mrf.mxu0
  %v534 = vadd.f32 %v514, %v533
  %535 = vdwg.mxu0
  %536 = vmatpush.xpose.msra.mxu0 0.0
  %537 = vmatpush.xpose.msra.mxu0 0.0
  %538 = vmatpush.xpose.msra.mxu0 0.0
  %539 = vmatpush.xpose.msra.mxu0 0.0
  %540 = vmatpush.xpose.msra.mxu0 0.0
  %541 = vmatpush.xpose.msra.mxu0 0.0
  %542 = vmatpush.xpose.msra.mxu0 0.0
  %543 = vmatpush.xpose.msra.mxu0 0.0
  %544 = vmatpush.xpose.msra.mxu0 0.0
  %545 = vmatpush.xpose.msra.mxu0 0.0
  %546 = vmatpush.xpose.msra.mxu0 0.0
  %547 = vmatpush.xpose.msra.mxu0 0.0
  %548 = vmatpush.xpose.msra.mxu0 0.0
  %549 = vmatpush.xpose.msra.mxu0 0.0
  %550 = vmatpush.xpose.msra.mxu0 0.0
  %551 = vmatpush.xpose.msra.mxu0 %v482
  %552 = vmatmul.f32.gmra.mxu0 %v463
  %v553 = vpop.f32.mrf.mxu0
  %v554 = vadd.f32 %v534, %v553
  %555 = vdwg.mxu0
  %556 = vmatpush.xpose.msra.mxu0 0.0
  %557 = vmatpush.xpose.msra.mxu0 0.0
  %558 = vmatpush.xpose.msra.mxu0 0.0
  %559 = vmatpush.xpose.msra.mxu0 0.0
  %560 = vmatpush.xpose.msra.mxu0 0.0
  %561 = vmatpush.xpose.msra.mxu0 0.0
  %562 = vmatpush.xpose.msra.mxu0 0.0
  %563 = vmatpush.xpose.msra.mxu0 0.0
  %564 = vmatpush.xpose.msra.mxu0 0.0
  %565 = vmatpush.xpose.msra.mxu0 0.0
  %566 = vmatpush.xpose.msra.mxu0 0.0
  %567 = vmatpush.xpose.msra.mxu0 0.0
  %568 = vmatpush.xpose.msra.mxu0 0.0
  %569 = vmatpush.xpose.msra.mxu0 0.0
  %570 = vmatpush.xpose.msra.mxu0 0.0
  %571 = vmatpush.xpose.msra.mxu0 %v483
  %572 = vmatmul.f32.gmra.mxu0 %v464
  %v573 = vpop.f32.mrf.mxu0
  %v574 = vadd.f32 %v554, %v573
  %575 = vdwg.mxu0
  %576 = vmatpush.xpose.msra.mxu0 0.0
  %577 = vmatpush.xpose.msra.mxu0 0.0
  %578 = vmatpush.xpose.msra.mxu0 0.0
  %579 = vmatpush.xpose.msra.mxu0 0.0
  %580 = vmatpush.xpose.msra.mxu0 0.0
  %581 = vmatpush.xpose.msra.mxu0 0.0
  %582 = vmatpush.xpose.msra.mxu0 0.0
  %583 = vmatpush.xpose.msra.mxu0 0.0
  %584 = vmatpush.xpose.msra.mxu0 0.0
  %585 = vmatpush.xpose.msra.mxu0 0.0
  %586 = vmatpush.xpose.msra.mxu0 0.0
  %587 = vmatpush.xpose.msra.mxu0 0.0
  %588 = vmatpush.xpose.msra.mxu0 0.0
  %589 = vmatpush.xpose.msra.mxu0 0.0
  %590 = vmatpush.xpose.msra.mxu0 0.0
  %591 = vmatpush.xpose.msra.mxu0 %v484
  %592 = vmatmul.f32.gmra.mxu0 %v465
  %v593 = vpop.f32.mrf.mxu0
  %v594 = vadd.f32 %v574, %v593
  %595 = vdwg.mxu0
  %596 = vmatpush.xpose.msra.mxu0 0.0
  %597 = vmatpush.xpose.msra.mxu0 0.0
  %598 = vmatpush.xpose.msra.mxu0 0.0
  %599 = vmatpush.xpose.msra.mxu0 0.0
  %600 = vmatpush.xpose.msra.mxu0 0.0
  %601 = vmatpush.xpose.msra.mxu0 0.0
  %602 = vmatpush.xpose.msra.mxu0 0.0
  %603 = vmatpush.xpose.msra.mxu0 0.0
  %604 = vmatpush.xpose.msra.mxu0 0.0
  %605 = vmatpush.xpose.msra.mxu0 0.0
  %606 = vmatpush.xpose.msra.mxu0 0.0
  %607 = vmatpush.xpose.msra.mxu0 0.0
  %608 = vmatpush.xpose.msra.mxu0 0.0
  %609 = vmatpush.xpose.msra.mxu0 0.0
  %610 = vmatpush.xpose.msra.mxu0 0.0
  %611 = vmatpush.xpose.msra.mxu0 %v485
  %612 = vmatmul.f32.gmra.mxu0 %v466
  %v613 = vpop.f32.mrf.mxu0
  %v614 = vadd.f32 %v594, %v613
  %615 = vdwg.mxu0
  %616 = vmatpush.xpose.msra.mxu0 0.0
  %617 = vmatpush.xpose.msra.mxu0 0.0
  %618 = vmatpush.xpose.msra.mxu0 0.0
  %619 = vmatpush.xpose.msra.mxu0 0.0
  %620 = vmatpush.xpose.msra.mxu0 0.0
  %621 = vmatpush.xpose.msra.mxu0 0.0
  %622 = vmatpush.xpose.msra.mxu0 0.0
  %623 = vmatpush.xpose.msra.mxu0 0.0
  %624 = vmatpush.xpose.msra.mxu0 0.0
  %625 = vmatpush.xpose.msra.mxu0 0.0
  %626 = vmatpush.xpose.msra.mxu0 0.0
  %627 = vmatpush.xpose.msra.mxu0 0.0
  %628 = vmatpush.xpose.msra.mxu0 0.0
  %629 = vmatpush.xpose.msra.mxu0 0.0
  %630 = vmatpush.xpose.msra.mxu0 0.0
  %631 = vmatpush.xpose.msra.mxu0 %v486
  %632 = vmatmul.f32.gmra.mxu0 %v467
  %v633 = vpop.f32.mrf.mxu0
  %v634 = vadd.f32 %v614, %v633
  %635 = vdwg.mxu0
  %636 = vmatpush.xpose.msra.mxu0 0.0
  %637 = vmatpush.xpose.msra.mxu0 0.0
  %638 = vmatpush.xpose.msra.mxu0 0.0
  %639 = vmatpush.xpose.msra.mxu0 0.0
  %640 = vmatpush.xpose.msra.mxu0 0.0
  %641 = vmatpush.xpose.msra.mxu0 0.0
  %642 = vmatpush.xpose.msra.mxu0 0.0
  %643 = vmatpush.xpose.msra.mxu0 0.0
  %644 = vmatpush.xpose.msra.mxu0 0.0
  %645 = vmatpush.xpose.msra.mxu0 0.0
  %646 = vmatpush.xpose.msra.mxu0 0.0
  %647 = vmatpush.xpose.msra.mxu0 0.0
  %648 = vmatpush.xpose.msra.mxu0 0.0
  %649 = vmatpush.xpose.msra.mxu0 0.0
  %650 = vmatpush.xpose.msra.mxu0 0.0
  %651 = vmatpush.xpose.msra.mxu0 %v487
  %652 = vmatmul.f32.gmra.mxu0 %v468
  %v653 = vpop.f32.mrf.mxu0
  %v654 = vadd.f32 %v634, %v653
  %655 = vdwg.mxu0
  %v656 = vadd.f32 %v457, %v654
  %657 = vst.msk [vmem:[%s4] sm:$0x3] %vm252, %v656
  // Predicated region
  $region14: #{simplified_mmd_loss.1} parent=0 // pred_check
    _
  $region15: #{simplified_mmd_loss.1} parent=0 // pred_check_branch
    %659 = sbr.rel (0) target = $region17
  $region16: #{simplified_mmd_loss.1} parent=0 // pred_region
    _
  $region17: #{simplified_mmd_loss.1} parent=0 // pred_fallthru
    _
  // Predicated region
  $region18: #{simplified_mmd_loss.1} parent=0 // pred_check
    _
  $region19: #{simplified_mmd_loss.1} parent=0 // pred_check_branch
    %661 = sbr.rel (0) target = $region21
  $region20: #{simplified_mmd_loss.1} parent=0 // pred_region
    _
  $region21: #{simplified_mmd_loss.1} parent=0 // pred_fallthru
    _
  // Predicated region
  $region22: #{simplified_mmd_loss.1} parent=0 // pred_check
    _
  $region23: #{simplified_mmd_loss.1} parent=0 // pred_check_branch
    %663 = sbr.rel (0) target = $region25
  $region24: #{simplified_mmd_loss.1} parent=0 // pred_region
    _
  $region25: #{simplified_mmd_loss.1} parent=0 // pred_fallthru
    _
  // Predicated region
  $region26: #{simplified_mmd_loss.1} parent=0 // pred_check
    _
  $region27: #{simplified_mmd_loss.1} parent=0 // pred_check_branch
    %665 = sbr.rel (0) target = $region29
  $region28: #{simplified_mmd_loss.1} parent=0 // pred_region
    _
  $region29: #{simplified_mmd_loss.1} parent=0 // pred_fallthru
    _
  // Predicated region
  $region30: #{simplified_mmd_loss.1} parent=0 // pred_check
    _
  $region31: #{simplified_mmd_loss.1} parent=0 // pred_check_branch
    %667 = sbr.rel (0) target = $region33
  $region32: #{simplified_mmd_loss.1} parent=0 // pred_region
    _
  $region33: #{simplified_mmd_loss.1} parent=0 // pred_fallthru
    _
  // Predicated region
  $region34: #{simplified_mmd_loss.1} parent=0 // pred_check
    _
  $region35: #{simplified_mmd_loss.1} parent=0 // pred_check_branch
    %669 = sbr.rel (0) target = $region37
  $region36: #{simplified_mmd_loss.1} parent=0 // pred_region
    _
  $region37: #{simplified_mmd_loss.1} parent=0 // pred_fallthru
    _

</llo_original>
